<compile_context>
chip_gen: v5e
topology: v5e:2x2
jax: 0.10.0
libtpu: 0.0.40
codegen_flags: <defaults>
</compile_context>

<pallas_src>
import jax
import jax.numpy as jnp
from jax.experimental import pallas as pl
from jax.experimental.pallas import tpu as pltpu


def _round_up(x, m):
    return (x + m - 1) // m * m


def _vmem_budget_and_limit():
    """Per-generation VMEM working-set budget and scoped-VMEM limit (bytes)."""
    cap = None
    try:
        info = pltpu.get_tpu_info()
        cap = getattr(info, "vmem_capacity_bytes", None)
    except Exception:
        cap = None
    if not cap:
        cap = 64 << 20  # conservative fallback (true for v7x, under-counts v5e/v6e)
    # Use up to ~half of physical VMEM for the pipelined working set; cap the
    # scoped limit below physical to leave compiler headroom.
    budget = max(8 << 20, min(cap // 2, 64 << 20))
    limit = min(cap - (8 << 20), budget + (16 << 20))
    return int(budget), int(limit)


def _logreg_kernel(x_ref, wt_ref, b_ref, o_ref):
    # x_ref: [tile_b, H]    wt_ref: [H, C_pad] (pre-transposed)    b_ref: [1, C_pad]
    # Plain NN matmul on the MXU, f32 accumulation, bias add on the VPU.
    acc = jnp.dot(x_ref[...], wt_ref[...], preferred_element_type=jnp.float32)
    o_ref[...] = (acc + b_ref[...]).astype(o_ref.dtype)
    # TODO(synk): if a downstream log-softmax / argmax consumer exists, fuse it
    # here (EUP/XLU slots are idle) and mask the padded classes to -inf.


def logreg_forward(x, weight, bias, *, tile_b=None):
    """y = x @ weight.T + bias  (PyTorch nn.Linear semantics).

    x:      [B, H]
    weight: [C, H]  (PyTorch layout; transposed once in the wrapper)
    bias:   [C]
    returns [B, C] in x's dtype.
    """
    B, H = x.shape
    C, H_w = weight.shape
    assert H_w == H, "weight must be [n_classes, hid_dim]"
    out_dtype = x.dtype

    # One-time, tiny W-side preprocessing (W << x for multi-step grids):
    # cast to x's dtype (avoid per-step in-kernel converts), pad classes to a
    # lane-dense multiple of 128, and transpose to [H, C_pad].
    if weight.dtype != x.dtype:
        weight = weight.astype(x.dtype)
    C_pad = _round_up(C, 128)
    if C_pad != C:
        weight = jnp.pad(weight, ((0, C_pad - C), (0, 0)))
        bias = jnp.pad(bias, ((0, C_pad - C),))
    weight_t = weight.T                      # [H, C_pad]
    b2d = bias.astype(jnp.float32).reshape(1, C_pad)

    x_itemsize = jnp.dtype(x.dtype).itemsize
    out_itemsize = jnp.dtype(out_dtype).itemsize
    budget, vmem_limit = _vmem_budget_and_limit()

    def _working_set(tb):
        # 2 x-buffers + 2 out-buffers (double-buffered) + resident W (counted
        # x2 conservatively) + bias.
        return (2 * tb * H * x_itemsize
                + 2 * tb * C_pad * out_itemsize
                + 2 * H * C_pad * x_itemsize
                + 2 * C_pad * 4)

    # --- Batch tile selection: size by bytes (~4 MiB x tile), clamp to VMEM. --
    if tile_b is None:
        target_x_tile_bytes = 4 << 20
        tile_b = max(8, _round_up(target_x_tile_bytes // max(1, H * x_itemsize), 8))
        if tile_b >= B:
            tile_b = B                        # single full-extent tile (any B is legal)
        while tile_b > 8 and _working_set(tile_b) > budget:
            tile_b = max(8, _round_up(tile_b // 2, 8))
        # v7x: make sure both TensorCores get work when the problem is big.
        if pl.cdiv(B, tile_b) < 2 and B >= 16 and B * H * x_itemsize >= (4 << 20):
            tile_b = max(8, _round_up(pl.cdiv(B, 2), 8))
    else:
        tile_b = int(tile_b)
        if tile_b >= B:
            tile_b = B
        else:
            tile_b = max(8, _round_up(tile_b, 8))   # sub-B tiles must be 8-aligned

    # --- Grid: cdiv handles ragged B (no wrapper-side pad of x). -------------
    num_steps = pl.cdiv(B, tile_b)

    out = pl.pallas_call(
        _logreg_kernel,
        out_shape=jax.ShapeDtypeStruct((B, C_pad), out_dtype),
        grid_spec=pltpu.PrefetchScalarGridSpec(
            num_scalar_prefetch=0,
            grid=(num_steps,),
            in_specs=[
                pl.BlockSpec((tile_b, H), lambda i: (i, 0)),   # x tile (pipelined)
                pl.BlockSpec((H, C_pad), lambda i: (0, 0)),    # W^T resident
                pl.BlockSpec((1, C_pad), lambda i: (0, 0)),    # bias resident
            ],
            out_specs=pl.BlockSpec((tile_b, C_pad), lambda i: (i, 0)),
        ),
        compiler_params=pltpu.CompilerParams(
            dimension_semantics=("parallel",),   # batch axis shards across TCs (v7x)
            vmem_limit_bytes=vmem_limit,
        ),
    )(x, weight_t, b2d)

    # Only the class-column padding remains to strip (batch is never padded).
    # Callers that tolerate zero-logit padding columns could consume `out`
    # directly and skip this copy.
    if C_pad != C:
        out = out[:, :C]
    return out


if __name__ == "__main__":
    # Small shapes consistent with LogReg(hid_dim, n_classes)
    batch, hid_dim, n_classes = 8, 32, 16

    key = jax.random.PRNGKey(0)
    kx, kw, kb = jax.random.split(key, 3)

    # Deterministic parameter init (mimic nn.Linear's U(-1/sqrt(H), 1/sqrt(H)))
    bound = 1.0 / (hid_dim ** 0.5)
    weight = jax.random.uniform(kw, (n_classes, hid_dim), jnp.float32, -bound, bound)
    bias = jax.random.uniform(kb, (n_classes,), jnp.float32, -bound, bound)
    x = jax.random.normal(kx, (batch, hid_dim), jnp.float32)

    # Case 1: tiny demo shapes, single full-extent tile.
    y = jax.block_until_ready(logreg_forward(x, weight, bias))
    y_ref = x @ weight.T + bias
    assert y.shape == (batch, n_classes)
    assert jnp.allclose(y, y_ref, atol=1e-4, rtol=1e-4), "mismatch vs reference (case 1)"

    # Case 2: ragged batch + multi-step grid with a partial last tile
    # (exercises the cdiv path; no wrapper-side padding of x).
    x2 = jax.random.normal(jax.random.PRNGKey(1), (40, hid_dim), jnp.float32)
    y2 = jax.block_until_ready(logreg_forward(x2, weight, bias, tile_b=16))
    y2_ref = x2 @ weight.T + bias
    assert y2.shape == (40, n_classes)
    assert jnp.allclose(y2, y2_ref, atol=1e-4, rtol=1e-4), "mismatch vs reference (case 2)"

    print("KERNEL_OK")
</pallas_src>

<mosaic_0001>
module attributes {stable_mosaic.version = 11 : i64} {
  func.func @_logreg_kernel(%arg0: i32, %arg1: memref<8x32xf32, #tpu.memory_space<vmem>>, %arg2: memref<32x128xf32, #tpu.memory_space<vmem>>, %arg3: memref<1x128xf32, #tpu.memory_space<vmem>>, %arg4: memref<8x128xf32, #tpu.memory_space<vmem>>) attributes {dimension_semantics = [#tpu.dimension_semantics<parallel>], iteration_bounds = array<i64: 1>, scalar_prefetch = 0 : i64, scratch_operands = 0 : i64, tpu.core_type = #tpu.core_type<tc>, window_params = [{transform_indices = @transform_0, window_bounds = array<i64: 8, 32>}, {pipeline_mode = #tpu.pipeline_mode<synchronous>, transform_indices = @transform_1, window_bounds = array<i64: 32, 128>}, {pipeline_mode = #tpu.pipeline_mode<synchronous>, transform_indices = @transform_2, window_bounds = array<i64: 1, 128>}, {transform_indices = @transform_3, window_bounds = array<i64: 8, 128>}]} {
    %c0 = arith.constant 0 : index
    %c0_0 = arith.constant 0 : index
    %0 = vector.load %arg1[%c0, %c0_0] : memref<8x32xf32, #tpu.memory_space<vmem>>, vector<8x32xf32>
    %c0_1 = arith.constant 0 : index
    %c0_2 = arith.constant 0 : index
    %1 = vector.load %arg2[%c0_1, %c0_2] : memref<32x128xf32, #tpu.memory_space<vmem>>, vector<32x128xf32>
    %cst = arith.constant dense<0.000000e+00> : vector<8x128xf32>
    %2 = tpu.matmul %0, %1, %cst {dimension_numbers = #tpu.dot_dimension_numbers<[1], [0], [0], [1], [0, 0, 1, 1], [], []>} : vector<8x32xf32>, vector<32x128xf32>, vector<8x128xf32> -> vector<8x128xf32>
    %c0_3 = arith.constant 0 : index
    %c0_4 = arith.constant 0 : index
    %3 = vector.load %arg3[%c0_3, %c0_4] : memref<1x128xf32, #tpu.memory_space<vmem>>, vector<1x128xf32>
    %4 = vector.broadcast %3 : vector<1x128xf32> to vector<8x128xf32>
    %5 = arith.addf %2, %4 : vector<8x128xf32>
    %c0_5 = arith.constant 0 : index
    %c0_6 = arith.constant 0 : index
    %6 = vector.load %arg4[%c0_5, %c0_6] : memref<8x128xf32, #tpu.memory_space<vmem>>, vector<8x128xf32>
    tpu.vector_store %arg4[%c0_5, %c0_6], %5 {strides = array<i32>} : memref<8x128xf32, #tpu.memory_space<vmem>>, vector<8x128xf32>,
    return
  }
  func.func @transform_0(%arg0: i32) -> (i32, i32) {
    %c0_i32 = arith.constant 0 : i32
    %c0_i32_0 = arith.constant 0 : i32
    return %arg0, %c0_i32 : i32, i32
  }
  func.func @transform_1(%arg0: i32) -> (i32, i32) {
    %c0_i32 = arith.constant 0 : i32
    %c0_i32_0 = arith.constant 0 : i32
    %c0_i32_1 = arith.constant 0 : i32
    return %c0_i32, %c0_i32_0 : i32, i32
  }
  func.func @transform_2(%arg0: i32) -> (i32, i32) {
    %c0_i32 = arith.constant 0 : i32
    %c0_i32_0 = arith.constant 0 : i32
    %c0_i32_1 = arith.constant 0 : i32
    return %c0_i32, %c0_i32_0 : i32, i32
  }
  func.func @transform_3(%arg0: i32) -> (i32, i32) {
    %c0_i32 = arith.constant 0 : i32
    %c0_i32_0 = arith.constant 0 : i32
    return %arg0, %c0_i32 : i32, i32
  }
}

</mosaic_0001>

<llo_original>
// kernel: tpu_custom_call.1
$region0: #{tpu_custom_call.1}
  #allocation0 [shape = 'u32[]', space=smem, size = 0x4, offset = 0x4, fixed_abs, tag = 'smem constant byte address 0x4 - core index']
  #allocation1 [shape = 'u32[72,128]{1,0:T(1,128)}', space=vmem, size = 0x9000, scoped, tag = 'internal scratch']
  %s0 = inlined_call_operand.hbm [shape: f32[8,32], index: 0, kind: input, shape index: {}]
  %s1 = inlined_call_operand.hbm [shape: f32[32,128], index: 1, kind: input, shape index: {}]
  %s2 = inlined_call_operand.vmem [shape: f32[1,128], index: 2, kind: input, shape index: {}]
  %s3 = inlined_call_operand.hbm [shape: f32[8,128], index: 3, kind: output, shape index: {}]
  %s4 = sld [smem:[#allocation0]]
  $region30: #{tpu_custom_call.1} parent=0
    _
  %s6 = ssub.s32 1, %s4
  %s7 = scalar_select 0, %s6, %s4
  $region1: #{tpu_custom_call.1} parent=0
    #allocation2 [shape = 'u8[4096]{0}', space=vmem, size = 0x1000, scoped, tag = 'input window, operand 0, single buffered']
    #allocation3 [shape = 's32[1]{0}', space=sflag, size = 0x4, scoped, tag = 'scoped memory for tpu_custom_call.1']
    #allocation4 [shape = 's32[1]{0}', space=sflag, size = 0x4, scoped, tag = 'scoped memory for tpu_custom_call.1']
    #allocation5 [shape = 'u8[16384]{0}', space=vmem, size = 0x4000, scoped, tag = 'input window, operand 1, single buffered']
    #allocation6 [shape = 's32[1]{0}', space=sflag, size = 0x4, scoped, tag = 'scoped memory for tpu_custom_call.1']
    #allocation7 [shape = 'u8[4096]{0}', space=vmem, size = 0x1000, scoped, tag = 'output window, operand 0, single buffered']
    %8 = vsyncpa [#allocation3], 0
    %9 = vsyncpa [#allocation6], 0
    %10 = vsyncpa [#allocation4], 0
    // Predicated region
    $region2: #{tpu_custom_call.1} parent=1 // pred_check
      _
    $region3: #{tpu_custom_call.1} parent=1 // pred_check_branch
      %12 = sbr.rel (0) target = $region5
    $region4: #{tpu_custom_call.1} parent=1 // pred_region
      %14 = vsyncadd [#allocation3], 0
      %s16 = sshll.u32 %s0, 4
      %s17 = int_to_ptr.hbm [resolvable:$true] %s16
      %s18 = sshll.u32 [#allocation2], 4
      %s19 = int_to_ptr.vmem [resolvable:$true] %s18
      %21 = dma.hbm_to_vmem [thread:$0]  %s17, 128, %s19, [#allocation3]
    $region5: #{tpu_custom_call.1} parent=1 // pred_fallthru
      _
    // Predicated region
    $region6: #{tpu_custom_call.1} parent=1 // pred_check
      _
    $region7: #{tpu_custom_call.1} parent=1 // pred_check_branch
      %23 = sbr.rel (0) target = $region9
    $region8: #{tpu_custom_call.1} parent=1 // pred_region
      %25 = vsyncadd [#allocation6], 0
      %s26 = sshll.u32 %s1, 4
      %s27 = int_to_ptr.hbm [resolvable:$true] %s26
      %s28 = sshll.u32 [#allocation5], 4
      %s29 = int_to_ptr.vmem [resolvable:$true] %s28
      %34 = dma.hbm_to_vmem [thread:$0]  %s27, 512, %s29, [#allocation6], 128, 128, 8
    $region9: #{tpu_custom_call.1} parent=1 // pred_fallthru
      _
    // Predicated region
    $region10: #{tpu_custom_call.1} parent=1 // pred_check
      _
    $region11: #{tpu_custom_call.1} parent=1 // pred_check_branch
      %36 = sbr.rel (0) target = $region13
    $region12: #{tpu_custom_call.1} parent=1 // pred_region
      _
    $region13: #{tpu_custom_call.1} parent=1 // pred_fallthru
      _
    // Predicated region
    $region14: #{tpu_custom_call.1} parent=1 // pred_check
      _
    $region15: #{tpu_custom_call.1} parent=1 // pred_check_branch
      %38 = sbr.rel (0) target = $region17
    $region16: #{tpu_custom_call.1} parent=1 // pred_region
      %40 = dma.done [#allocation3], 128
    $region17: #{tpu_custom_call.1} parent=1 // pred_fallthru
      _
    // Predicated region
    $region18: #{tpu_custom_call.1} parent=1 // pred_check
      _
    $region19: #{tpu_custom_call.1} parent=1 // pred_check_branch
      %42 = sbr.rel (0) target = $region21
    $region20: #{tpu_custom_call.1} parent=1 // pred_region
      %44 = dma.done [#allocation6], 512
    $region21: #{tpu_custom_call.1} parent=1 // pred_fallthru
      _
    %v45 = vld [vmem:[#allocation2] sm:$0xff]
    %v46 = vld [vmem:[#allocation5] sm:$0xff]
    %v47 = vld [vmem:[#allocation5 + $0x8] sm:$0xff]
    %v48 = vld [vmem:[#allocation5 + $0x10] sm:$0xff]
    %v49 = vld [vmem:[#allocation5 + $0x18] sm:$0xff]
    %v50 = vld [vmem:[%s2] sm:$0x1]
    %v52 = vperm.slane %v50, 0
    %vm54 = vcmask 261120
    %v56 = vsel %vm54, %v45, 0
    %58 = vmatpush.msra.mxu0 0.0
    %59 = vmatpush.msra.mxu0 0.0
    %60 = vmatpush.msra.mxu0 0.0
    %61 = vmatpush.msra.mxu0 0.0
    %62 = vmatpush.msra.mxu0 0.0
    %63 = vmatpush.msra.mxu0 0.0
    %64 = vmatpush.msra.mxu0 0.0
    %65 = vmatpush.msra.mxu0 0.0
    %66 = vmatpush.msra.mxu0 0.0
    %67 = vmatpush.msra.mxu0 0.0
    %68 = vmatpush.msra.mxu0 0.0
    %69 = vmatpush.msra.mxu0 0.0
    %70 = vmatpush.msra.mxu0 %v49
    %71 = vmatpush.msra.mxu0 %v48
    %72 = vmatpush.msra.mxu0 %v47
    %73 = vmatpush.msra.mxu0 %v46
    %74 = vmatmul.f32.gmra.mxu0 %v56
    %v75 = vpop.f32.mrf.mxu0
    %v76 = vadd.f32 %v52, %v75
    %77 = vdwg.mxu0
    %78 = vst [vmem:[#allocation7] sm:$0xff] %v76
    // Predicated region
    $region22: #{tpu_custom_call.1} parent=1 // pred_check
      _
    $region23: #{tpu_custom_call.1} parent=1 // pred_check_branch
      %80 = sbr.rel (0) target = $region25
    $region24: #{tpu_custom_call.1} parent=1 // pred_region
      %82 = vsyncadd [#allocation4], 0
      %s84 = sshll.u32 [#allocation7], 4
      %s85 = int_to_ptr.vmem [resolvable:$true] %s84
      %s86 = sshll.u32 %s3, 4
      %s87 = int_to_ptr.hbm [resolvable:$true] %s86
      %89 = dma.vmem_to_hbm [thread:$0]  %s85, 128, %s87, [#allocation4]
    $region25: #{tpu_custom_call.1} parent=1 // pred_fallthru
      _
    // Predicated region
    $region26: #{tpu_custom_call.1} parent=1 // pred_check
      _
    $region27: #{tpu_custom_call.1} parent=1 // pred_check_branch
      %91 = sbr.rel (0) target = $region29
    $region28: #{tpu_custom_call.1} parent=1 // pred_region
      %93 = dma.done [#allocation4], 128
    $region29: #{tpu_custom_call.1} parent=1 // pred_fallthru
      _
    %94 = vsyncpa [#allocation3], 1
    %95 = vsyncpa [#allocation6], 1
    %96 = vsyncpa [#allocation4], 1

</llo_original>
